<compile_context>
chip_gen: v7x
topology: tpu7x:2x2x1
jax: 0.10.0
libtpu: 0.0.40
codegen_flags: <defaults>
</compile_context>

<pallas_src>
import functools

import jax
import jax.numpy as jnp
from jax.experimental import pallas as pl
from jax.experimental.pallas import tpu as pltpu

_LANES = 128


def _round_up(v, m):
    return ((v + m - 1) // m) * m


def _vmem_capacity_bytes():
    """Physical VMEM of the current TPU generation (fallback: v7x per-TC 64 MiB)."""
    try:
        return int(pltpu.get_tpu_info().vmem_capacity_bytes)
    except Exception:
        return 64 << 20


def _vmem_limit(est_bytes, cap_bytes):
    """Scoped VMEM limit: at least 24 MiB, at most 3/4 of physical VMEM."""
    return int(min(cap_bytes * 3 // 4, max(24 << 20, est_bytes)))


def _pick_seq_tile(seq_len, max_rows):
    """Sequence tile (rows / grid step) and padded sequence length.

    Preference order: whole sequence if it fits the per-buffer budget; an
    MXU-height-aligned (multiple-of-256) divisor of seq_len; any non-degenerate
    sublane-aligned divisor; otherwise zero-pad seq_len to a tile multiple.
    """
    if seq_len <= max_rows:
        return seq_len, seq_len
    cap = max(8, (min(seq_len, max_rows) // 8) * 8)
    for step in (256, 8):
        if cap < step:
            continue
        t = (cap // step) * step
        floor = max(step, cap // 4)          # avoid degenerate tiny tiles
        while t >= floor:
            if seq_len % t == 0:
                return t, seq_len
            t -= step
    t = (cap // 256) * 256 if cap >= 256 else cap
    return t, _round_up(seq_len, t)


def _pick_k_tile(k_dim, tb, x_itemsize, w_itemsize, q_pad, x_budget):
    """Feature (K) tile for the flat path; K-tiles the weight when it is big."""
    if (tb * k_dim * x_itemsize <= x_budget
            and k_dim * q_pad * w_itemsize <= (4 << 20)):
        return k_dim, k_dim                                   # whole K as one block
    cap = min(x_budget // max(1, tb * x_itemsize),
              (2 << 20) // max(1, q_pad * w_itemsize))
    tk = max(_LANES, (cap // _LANES) * _LANES)
    return tk, _round_up(k_dim, tk)


def _argmin_lanes(d2, q_dim):
    """First-occurrence argmin over the lane (Q) axis; pad lanes forced to +inf."""
    idx = jax.lax.broadcasted_iota(jnp.int32, d2.shape, 1)
    d2 = jnp.where(idx < q_dim, d2, jnp.inf)
    mn = jnp.min(d2, axis=-1, keepdims=True)
    return jnp.min(jnp.where(d2 == mn, idx, q_dim), axis=-1, keepdims=True)


# ---------------------------------------------------------------------------
# raw_signal=True kernel.  Grid (B, num_l); per step:
#   x_ref      : (TL, D)    one sequence tile of batch element b (batch squeezed)
#   wt_ref     : (D, Qp)    projection weight^T, Q zero-padded to 128 lanes
#   cbs_ref    : (2, Qp)    row0 = sum_c cb[q,c], row1 = sum_c cb[q,c]^2
#   labels_ref : (1, 128)   int32 label broadcast over lanes (lane-dense store)
#   s_t_ref    : (1, Qp)    f32 running sum_l t[b,l,q]
#   s_t2_ref   : (1, Qp)    f32 running sum_l t[b,l,q]^2
# ---------------------------------------------------------------------------
def _rpq_raw_kernel(x_ref, wt_ref, cbs_ref, labels_ref, s_t_ref, s_t2_ref, *,
                    codebook_size, seq_len, q_dim, proj_dtype):
    l = pl.program_id(1)

    @pl.when(l == 0)
    def _init():
        s_t_ref[...] = jnp.zeros_like(s_t_ref)
        s_t2_ref[...] = jnp.zeros_like(s_t2_ref)

    # Cast the tile in VMEM (cheap VPU op hidden under the MXU) instead of an
    # extra wrapper-side HBM pass; MXU matmul with f32 accumulation.
    x = x_ref[...].astype(proj_dtype)
    t = jnp.dot(x, wt_ref[...], preferred_element_type=jnp.float32)   # (TL, Qp)
    s_t_ref[...] += jnp.sum(t, axis=0, keepdims=True)
    s_t2_ref[...] += jnp.sum(t * t, axis=0, keepdims=True)

    @pl.when(l == pl.num_programs(1) - 1)
    def _finalize():
        cbs = cbs_ref[...]                    # (2, Qp), codebook sums hoisted to init
        s_cb = cbs[0:1, :]
        s_cb2 = cbs[1:2, :]
        # sum_{l,c} (t[b,l,q] - cb[q,c])^2 expanded; sqrt dropped (monotone).
        # seq_len is the TRUE L (zero-padded rows contribute nothing to the sums).
        d2 = (float(codebook_size) * s_t2_ref[...]
              - 2.0 * s_t_ref[...] * s_cb
              + float(seq_len) * s_cb2)                              # (1, Qp)
        label = _argmin_lanes(d2, q_dim)                             # (1, 1)
        labels_ref[...] = jnp.broadcast_to(label, labels_ref.shape)


# ---------------------------------------------------------------------------
# raw_signal=False kernel.  Grid (num_b, num_k); per step:
#   x_ref      : (TB, TK)   batch tile of the flattened input
#   wt_ref     : (TK, Qp)   K-tile of the projection weight^T
#   cbs_ref    : (2, Qp)    codebook sums (as above)
#   labels_ref : (TB, 128)  int32 labels, lane-broadcast per row
#   t_acc_ref  : (TB, Qp)   f32 targets accumulator over K tiles
# ---------------------------------------------------------------------------
def _rpq_flat_kernel(x_ref, wt_ref, cbs_ref, labels_ref, t_acc_ref, *,
                     codebook_size, q_dim, proj_dtype):
    k = pl.program_id(1)

    @pl.when(k == 0)
    def _init():
        t_acc_ref[...] = jnp.zeros_like(t_acc_ref)

    x = x_ref[...].astype(proj_dtype)
    t_acc_ref[...] += jnp.dot(x, wt_ref[...], preferred_element_type=jnp.float32)

    @pl.when(k == pl.num_programs(1) - 1)
    def _finalize():
        t = t_acc_ref[...]                                           # (TB, Qp)
        cbs = cbs_ref[...]
        s_cb = cbs[0:1, :]
        s_cb2 = cbs[1:2, :]
        d2 = float(codebook_size) * t * t - 2.0 * t * s_cb + s_cb2   # (TB, Qp)
        label = _argmin_lanes(d2, q_dim)                             # (TB, 1)
        labels_ref[...] = jnp.broadcast_to(label, labels_ref.shape)


class RandomProjectionQuantizer:
    """JAX/Pallas port of the PyTorch RandomProjectionQuantizer module."""

    def __init__(self, input_dim, quantizer_dim, codebook_size, key,
                 proj_dtype=jnp.float32):
        k_w, k_cb = jax.random.split(key)
        # nn.Linear(input_dim, quantizer_dim, bias=False) weight (Q, D), xavier_uniform_.
        bound = (6.0 / (input_dim + quantizer_dim)) ** 0.5
        self.weight = jax.random.uniform(
            k_w, (quantizer_dim, input_dim), jnp.float32, -bound, bound)
        # code_book = randn(Q, C)
        self.code_book = jax.random.normal(
            k_cb, (quantizer_dim, codebook_size), jnp.float32)

        self.input_dim = input_dim
        self.quantizer_dim = quantizer_dim
        self.codebook_size = codebook_size
        self.proj_dtype = jnp.dtype(proj_dtype)   # bf16 option for v6e/v7x matmul

        # Lane-padded MXU-friendly layouts, materialized once (not per call).
        self.q_pad = _round_up(quantizer_dim, _LANES)
        wt = jnp.zeros((input_dim, self.q_pad), jnp.float32)
        wt = wt.at[:, :quantizer_dim].set(self.weight.T)
        self.weight_t = wt.astype(self.proj_dtype)                 # (D, Qp)
        # Hoisted codebook reductions: row0 = sum_c cb, row1 = sum_c cb^2.
        cbs = jnp.zeros((2, self.q_pad), jnp.float32)
        cbs = cbs.at[0, :quantizer_dim].set(jnp.sum(self.code_book, axis=1))
        cbs = cbs.at[1, :quantizer_dim].set(
            jnp.sum(self.code_book * self.code_book, axis=1))
        self.cb_stats = cbs                                         # (2, Qp)

    # ------------------------------------------------------------------ raw --
    def _forward_raw(self, x3d, single_buffer):
        B, L, D = x3d.shape
        assert D == self.input_dim, "last dim must equal input_dim (nn.Linear contract)"
        Q, Qp, C = self.quantizer_dim, self.q_pad, self.codebook_size
        x_item = jnp.dtype(x3d.dtype).itemsize
        w_item = self.proj_dtype.itemsize

        cap = _vmem_capacity_bytes()
        x_budget = max(2 << 20, cap // 8)          # ~8 MiB on v7x, ~16 MiB on v5e/v6e
        max_rows = max(8, x_budget // max(1, x_item * D))
        tl, l_pad = _pick_seq_tile(L, max_rows)
        if l_pad != L:
            x3d = jnp.pad(x3d, ((0, 0), (0, l_pad - L), (0, 0)))
        num_l = l_pad // tl

        n_inv = 1 if single_buffer else 2
        est = (2 * _round_up(tl, 8) * _round_up(D, _LANES) * x_item   # x (double buffered)
               + n_inv * _round_up(D, 8) * Qp * w_item                # weight_t
               + n_inv * 8 * Qp * 4                                   # cb_stats
               + 2 * 8 * _LANES * 4                                   # label tiles
               + 2 * 8 * Qp * 4                                       # s_t / s_t2 scratch
               + (4 << 20))                                           # compiler headroom
        # TODO(synk): K-tile the raw-path weight when input_dim*q_pad reaches tens of MiB.
        inv = dict(pipeline_mode=pl.Buffered(1)) if single_buffer else {}

        kernel = functools.partial(_rpq_raw_kernel, codebook_size=C, seq_len=L,
                                   q_dim=Q, proj_dtype=self.proj_dtype)
        labels = pl.pallas_call(
            kernel,
            out_shape=jax.ShapeDtypeStruct((B, 1, _LANES), jnp.int32),
            grid=(B, num_l),
            in_specs=[
                pl.BlockSpec((None, tl, D), lambda b, l: (b, l, 0)),
                pl.BlockSpec((D, Qp), lambda b, l: (0, 0), **inv),
                pl.BlockSpec((2, Qp), lambda b, l: (0, 0), **inv),
            ],
            out_specs=pl.BlockSpec((None, 1, _LANES), lambda b, l: (b, 0, 0)),
            scratch_shapes=[
                pltpu.VMEM((1, Qp), jnp.float32),   # running sum_l t
                pltpu.VMEM((1, Qp), jnp.float32),   # running sum_l t^2
            ],
            compiler_params=pltpu.CompilerParams(
                dimension_semantics=("parallel", "arbitrary"),
                vmem_limit_bytes=_vmem_limit(est, cap)),
        )(x3d, self.weight_t, self.cb_stats)
        return labels[:, 0, 0]                                  # (B,) int32

    # ----------------------------------------------------------------- flat --
    def _forward_flat(self, x, single_buffer):
        B = x.shape[0]
        xf = x.reshape(B, -1)
        K = xf.shape[1]
        assert K == self.input_dim, "flattened width must equal input_dim"
        Q, Qp, C = self.quantizer_dim, self.q_pad, self.codebook_size
        x_item = jnp.dtype(xf.dtype).itemsize
        w_item = self.proj_dtype.itemsize

        cap = _vmem_capacity_bytes()
        x_budget = max(2 << 20, cap // 8)

        # Batch tiling: TB rows per grid step instead of one M=1 matvec per element.
        tb = B if B <= 256 else 256
        b_pad = _round_up(B, tb)
        tk, k_pad = _pick_k_tile(K, tb, x_item, w_item, Qp, x_budget)
        if b_pad != B or k_pad != K:
            xf = jnp.pad(xf, ((0, b_pad - B), (0, k_pad - K)))
        wt = self.weight_t
        if k_pad != K:
            wt = jnp.pad(wt, ((0, k_pad - K), (0, 0)))
        num_k = k_pad // tk

        n_cb = 1 if single_buffer else 2
        n_wt = n_cb if num_k == 1 else 2
        est = (2 * _round_up(tb, 8) * _round_up(tk, _LANES) * x_item
               + n_wt * _round_up(tk, 8) * Qp * w_item
               + n_cb * 8 * Qp * 4
               + 2 * _round_up(tb, 8) * _LANES * 4
               + _round_up(tb, 8) * Qp * 4
               + (4 << 20))
        inv = dict(pipeline_mode=pl.Buffered(1)) if single_buffer else {}
        w_inv = inv if num_k == 1 else {}     # weight streams when K is tiled

        kernel = functools.partial(_rpq_flat_kernel, codebook_size=C, q_dim=Q,
                                   proj_dtype=self.proj_dtype)
        labels = pl.pallas_call(
            kernel,
            out_shape=jax.ShapeDtypeStruct((b_pad, _LANES), jnp.int32),
            grid=(b_pad // tb, num_k),
            in_specs=[
                pl.BlockSpec((tb, tk), lambda b, k: (b, k)),
                pl.BlockSpec((tk, Qp), lambda b, k: (k, 0), **w_inv),
                pl.BlockSpec((2, Qp), lambda b, k: (0, 0), **inv),
            ],
            out_specs=pl.BlockSpec((tb, _LANES), lambda b, k: (b, 0)),
            scratch_shapes=[pltpu.VMEM((tb, Qp), jnp.float32)],   # targets accumulator
            compiler_params=pltpu.CompilerParams(
                dimension_semantics=("parallel", "arbitrary"),
                vmem_limit_bytes=_vmem_limit(est, cap)),
        )(xf, wt, self.cb_stats)
        return labels[:B, 0]                                    # (B,) int32

    def __call__(self, input_values, raw_signal):
        fwd = self._forward_raw if raw_signal else self._forward_flat
        try:
            return fwd(input_values, True)
        except Exception:
            # Graceful fallback if this jax build rejects BlockSpec pipeline_mode /
            # pl.Buffered(1); genuine errors re-raise identically on the retry.
            return fwd(input_values, False)


def _ref_forward(x, weight, code_book, raw_signal):
    """Pure-JAX mirror of the PyTorch forward (for verification)."""
    if raw_signal:
        t = jnp.einsum('bld,qd->blq', x, weight)                  # (B, L, Q)
        diff = t[..., None] - code_book[None, None]               # (B, L, Q, C)
        dist = jnp.sqrt(jnp.sum(diff * diff, axis=(1, 3)))        # (B, Q)
    else:
        xf = x.reshape(x.shape[0], -1)
        t = xf @ weight.T                                         # (B, Q)
        diff = t[..., None] - code_book[None]                     # (B, Q, C)
        dist = jnp.sqrt(jnp.sum(diff * diff, axis=-1))            # (B, Q)
    return jnp.argmin(dist, axis=-1)


if __name__ == "__main__":
    B, L, D, Q, C = 2, 8, 32, 16, 24

    key = jax.random.PRNGKey(0)
    k_param, k_x, k_x2 = jax.random.split(key, 3)

    rpq = RandomProjectionQuantizer(D, Q, C, k_param)

    # raw_signal=True path: (B, L, D)
    x = jax.random.normal(k_x, (B, L, D), jnp.float32)
    labels_raw = rpq(x, raw_signal=True)
    jax.block_until_ready(labels_raw)

    # raw_signal=False path: any shape that flattens to (B, input_dim)
    x_flat = jax.random.normal(k_x2, (B, 4, D // 4), jnp.float32)
    labels_flat = rpq(x_flat, raw_signal=False)
    jax.block_until_ready(labels_flat)

    ref_raw = _ref_forward(x, rpq.weight, rpq.code_book, True)
    ref_flat = _ref_forward(x_flat, rpq.weight, rpq.code_book, False)
    assert labels_raw.shape == (B,) and labels_flat.shape == (B,)
    assert bool(jnp.all(labels_raw == ref_raw))
    assert bool(jnp.all(labels_flat == ref_flat))

    print("KERNEL_OK")
</pallas_src>

<mosaic_0001>
module attributes {stable_mosaic.version = 11 : i64} {
  func.func @_rpq_raw_kernel(%arg0: i32, %arg1: i32, %arg2: memref<1x8x32xf32, #tpu.memory_space<vmem>>, %arg3: memref<32x128xf32, #tpu.memory_space<vmem>>, %arg4: memref<2x128xf32, #tpu.memory_space<vmem>>, %arg5: memref<1x1x128xi32, #tpu.memory_space<vmem>>, %arg6: memref<1x128xf32, #tpu.memory_space<vmem>>, %arg7: memref<1x128xf32, #tpu.memory_space<vmem>>) attributes {dimension_semantics = [#tpu.dimension_semantics<parallel>, #tpu.dimension_semantics<arbitrary>], iteration_bounds = array<i64: 2, 1>, scalar_prefetch = 0 : i64, scratch_operands = 2 : i64, tpu.core_type = #tpu.core_type<tc>, window_params = [{transform_indices = @transform_0, window_bounds = array<i64: 1, 8, 32>}, {pipeline_mode = #tpu.pipeline_mode<synchronous>, transform_indices = @transform_1, window_bounds = array<i64: 32, 128>}, {pipeline_mode = #tpu.pipeline_mode<synchronous>, transform_indices = @transform_2, window_bounds = array<i64: 2, 128>}, {transform_indices = @transform_3, window_bounds = array<i64: 1, 1, 128>}]} {
    %c0_i32 = arith.constant 0 : i32
    %0 = arith.cmpi eq, %arg1, %c0_i32 : i32
    %1 = arith.extui %0 : i1 to i32
    %c0_i32_0 = arith.constant 0 : i32
    %2 = arith.cmpi ne, %1, %c0_i32_0 : i32
    scf.if %2 {
      %cst_17 = arith.constant 0.000000e+00 : f32
      %21 = vector.broadcast %cst_17 : f32 to vector<1x128xf32>
      %c0_18 = arith.constant 0 : index
      %c0_19 = arith.constant 0 : index
      %22 = vector.load %arg6[%c0_18, %c0_19] : memref<1x128xf32, #tpu.memory_space<vmem>>, vector<1x128xf32>
      tpu.vector_store %arg6[%c0_18, %c0_19], %21 {strides = array<i32>} : memref<1x128xf32, #tpu.memory_space<vmem>>, vector<1x128xf32>,
      %cst_20 = arith.constant 0.000000e+00 : f32
      %23 = vector.broadcast %cst_20 : f32 to vector<1x128xf32>
      %c0_21 = arith.constant 0 : index
      %c0_22 = arith.constant 0 : index
      %24 = vector.load %arg7[%c0_21, %c0_22] : memref<1x128xf32, #tpu.memory_space<vmem>>, vector<1x128xf32>
      tpu.vector_store %arg7[%c0_21, %c0_22], %23 {strides = array<i32>} : memref<1x128xf32, #tpu.memory_space<vmem>>, vector<1x128xf32>,
    } else {
    }
    %c0 = arith.constant 0 : index
    %c0_1 = arith.constant 0 : index
    %c0_2 = arith.constant 0 : index
    %3 = vector.load %arg2[%c0, %c0_1, %c0_2] : memref<1x8x32xf32, #tpu.memory_space<vmem>>, vector<1x8x32xf32>
    %4 = vector.shape_cast %3 : vector<1x8x32xf32> to vector<8x32xf32>
    %c0_3 = arith.constant 0 : index
    %c0_4 = arith.constant 0 : index
    %5 = vector.load %arg3[%c0_3, %c0_4] : memref<32x128xf32, #tpu.memory_space<vmem>>, vector<32x128xf32>
    %cst = arith.constant dense<0.000000e+00> : vector<8x128xf32>
    %6 = tpu.matmul %4, %5, %cst {dimension_numbers = #tpu.dot_dimension_numbers<[1], [0], [0], [1], [0, 0, 1, 1], [], []>} : vector<8x32xf32>, vector<32x128xf32>, vector<8x128xf32> -> vector<8x128xf32>
    %c0_5 = arith.constant 0 : index
    %c0_6 = arith.constant 0 : index
    %7 = vector.load %arg6[%c0_5, %c0_6] : memref<1x128xf32, #tpu.memory_space<vmem>>, vector<1x128xf32>
    %cst_7 = arith.constant dense<0.000000e+00> : vector<128xf32>
    %8 = vector.multi_reduction <add>, %6, %cst_7 [0] : vector<8x128xf32> to vector<128xf32>
    %9 = vector.shape_cast %8 : vector<128xf32> to vector<1x128xf32>
    %10 = arith.addf %7, %9 : vector<1x128xf32>
    %c0_8 = arith.constant 0 : index
    %c0_9 = arith.constant 0 : index
    %11 = vector.load %arg6[%c0_8, %c0_9] : memref<1x128xf32, #tpu.memory_space<vmem>>, vector<1x128xf32>
    tpu.vector_store %arg6[%c0_8, %c0_9], %10 {strides = array<i32>} : memref<1x128xf32, #tpu.memory_space<vmem>>, vector<1x128xf32>,
    %c0_10 = arith.constant 0 : index
    %c0_11 = arith.constant 0 : index
    %12 = vector.load %arg7[%c0_10, %c0_11] : memref<1x128xf32, #tpu.memory_space<vmem>>, vector<1x128xf32>
    %13 = arith.mulf %6, %6 : vector<8x128xf32>
    %cst_12 = arith.constant dense<0.000000e+00> : vector<128xf32>
    %14 = vector.multi_reduction <add>, %13, %cst_12 [0] : vector<8x128xf32> to vector<128xf32>
    %15 = vector.shape_cast %14 : vector<128xf32> to vector<1x128xf32>
    %16 = arith.addf %12, %15 : vector<1x128xf32>
    %c0_13 = arith.constant 0 : index
    %c0_14 = arith.constant 0 : index
    %17 = vector.load %arg7[%c0_13, %c0_14] : memref<1x128xf32, #tpu.memory_space<vmem>>, vector<1x128xf32>
    tpu.vector_store %arg7[%c0_13, %c0_14], %16 {strides = array<i32>} : memref<1x128xf32, #tpu.memory_space<vmem>>, vector<1x128xf32>,
    %c0_i32_15 = arith.constant 0 : i32
    %18 = arith.cmpi eq, %arg1, %c0_i32_15 : i32
    %19 = arith.extui %18 : i1 to i32
    %c0_i32_16 = arith.constant 0 : i32
    %20 = arith.cmpi ne, %19, %c0_i32_16 : i32
    scf.if %20 {
      %c0_17 = arith.constant 0 : index
      %c0_18 = arith.constant 0 : index
      %21 = vector.load %arg4[%c0_17, %c0_18] : memref<2x128xf32, #tpu.memory_space<vmem>>, vector<2x128xf32>
      %22 = vector.extract_strided_slice %21 {offsets = [0, 0], sizes = [1, 128], strides = [1, 1]} : vector<2x128xf32> to vector<1x128xf32>
      %23 = vector.extract_strided_slice %21 {offsets = [1, 0], sizes = [1, 128], strides = [1, 1]} : vector<2x128xf32> to vector<1x128xf32>
      %c0_19 = arith.constant 0 : index
      %c0_20 = arith.constant 0 : index
      %24 = vector.load %arg7[%c0_19, %c0_20] : memref<1x128xf32, #tpu.memory_space<vmem>>, vector<1x128xf32>
      %cst_21 = arith.constant 2.400000e+01 : f32
      %25 = vector.broadcast %cst_21 : f32 to vector<1x128xf32>
      %26 = arith.mulf %25, %24 : vector<1x128xf32>
      %c0_22 = arith.constant 0 : index
      %c0_23 = arith.constant 0 : index
      %27 = vector.load %arg6[%c0_22, %c0_23] : memref<1x128xf32, #tpu.memory_space<vmem>>, vector<1x128xf32>
      %cst_24 = arith.constant 2.000000e+00 : f32
      %28 = vector.broadcast %cst_24 : f32 to vector<1x128xf32>
      %29 = arith.mulf %28, %27 : vector<1x128xf32>
      %30 = arith.mulf %29, %22 : vector<1x128xf32>
      %31 = arith.subf %26, %30 : vector<1x128xf32>
      %cst_25 = arith.constant 8.000000e+00 : f32
      %32 = vector.broadcast %cst_25 : f32 to vector<1x128xf32>
      %33 = arith.mulf %32, %23 : vector<1x128xf32>
      %34 = arith.addf %31, %33 : vector<1x128xf32>
      %35 = tpu.iota {dimensions = array<i32: 1>} : vector<1x128xi32>
      %c16_i32 = arith.constant 16 : i32
      %36 = vector.broadcast %c16_i32 : i32 to vector<1x128xi32>
      %37 = arith.cmpi slt, %35, %36 : vector<1x128xi32>
      %cst_26 = arith.constant 0x7F800000 : f32
      %38 = vector.broadcast %cst_26 : f32 to vector<1x128xf32>
      %39 = arith.select %37, %34, %38 : vector<1x128xi1>, vector<1x128xf32>
      %cst_27 = arith.constant dense<0x7F800000> : vector<1xf32>
      %40 = vector.multi_reduction <minimumf>, %39, %cst_27 [1] : vector<1x128xf32> to vector<1xf32>
      %41 = vector.shape_cast %40 : vector<1xf32> to vector<1x1xf32>
      %42 = vector.broadcast %41 : vector<1x1xf32> to vector<1x128xf32>
      %43 = arith.cmpf oeq, %39, %42 : vector<1x128xf32>
      %c16_i32_28 = arith.constant 16 : i32
      %44 = vector.broadcast %c16_i32_28 : i32 to vector<1x128xi32>
      %45 = arith.select %43, %35, %44 : vector<1x128xi1>, vector<1x128xi32>
      %cst_29 = arith.constant dense<2147483647> : vector<1xi32>
      %46 = vector.multi_reduction <minsi>, %45, %cst_29 [1] : vector<1x128xi32> to vector<1xi32>
      %47 = vector.shape_cast %46 : vector<1xi32> to vector<1x1xi32>
      %48 = vector.shape_cast %47 : vector<1x1xi32> to vector<1x1xi32>
      %49 = vector.broadcast %48 : vector<1x1xi32> to vector<1x128xi32>
      %c0_30 = arith.constant 0 : index
      %c0_31 = arith.constant 0 : index
      %c0_32 = arith.constant 0 : index
      %50 = vector.load %arg5[%c0_30, %c0_31, %c0_32] : memref<1x1x128xi32, #tpu.memory_space<vmem>>, vector<1x1x128xi32>
      %51 = vector.shape_cast %50 : vector<1x1x128xi32> to vector<1x128xi32>
      %52 = vector.shape_cast %49 : vector<1x128xi32> to vector<1x1x128xi32>
      tpu.vector_store %arg5[%c0_30, %c0_31, %c0_32], %52 {strides = array<i32>} : memref<1x1x128xi32, #tpu.memory_space<vmem>>, vector<1x1x128xi32>,
    } else {
    }
    return
  }
  func.func @transform_0(%arg0: i32, %arg1: i32) -> (i32, i32, i32) {
    %c0_i32 = arith.constant 0 : i32
    %c0_i32_0 = arith.constant 0 : i32
    return %arg0, %arg1, %c0_i32 : i32, i32, i32
  }
  func.func @transform_1(%arg0: i32, %arg1: i32) -> (i32, i32) {
    %c0_i32 = arith.constant 0 : i32
    %c0_i32_0 = arith.constant 0 : i32
    %c0_i32_1 = arith.constant 0 : i32
    return %c0_i32, %c0_i32_0 : i32, i32
  }
  func.func @transform_2(%arg0: i32, %arg1: i32) -> (i32, i32) {
    %c0_i32 = arith.constant 0 : i32
    %c0_i32_0 = arith.constant 0 : i32
    %c0_i32_1 = arith.constant 0 : i32
    return %c0_i32, %c0_i32_0 : i32, i32
  }
  func.func @transform_3(%arg0: i32, %arg1: i32) -> (i32, i32, i32) {
    %c0_i32 = arith.constant 0 : i32
    %c0_i32_0 = arith.constant 0 : i32
    %c0_i32_1 = arith.constant 0 : i32
    return %arg0, %c0_i32, %c0_i32_0 : i32, i32, i32
  }
}

module attributes {stable_mosaic.version = 11 : i64} {
  func.func @_rpq_raw_kernel(%arg0: i32, %arg1: i32, %arg2: memref<1x8x32xf32, #tpu.memory_space<vmem>>, %arg3: memref<32x128xf32, #tpu.memory_space<vmem>>, %arg4: memref<2x128xf32, #tpu.memory_space<vmem>>, %arg5: memref<1x1x128xi32, #tpu.memory_space<vmem>>, %arg6: memref<1x128xf32, #tpu.memory_space<vmem>>, %arg7: memref<1x128xf32, #tpu.memory_space<vmem>>) attributes {dimension_semantics = [#tpu.dimension_semantics<parallel>, #tpu.dimension_semantics<arbitrary>], iteration_bounds = array<i64: 2, 1>, scalar_prefetch = 0 : i64, scratch_operands = 2 : i64, tpu.core_type = #tpu.core_type<tc>, window_params = [{transform_indices = @transform_0, window_bounds = array<i64: 1, 8, 32>}, {pipeline_mode = #tpu.pipeline_mode<synchronous>, transform_indices = @transform_1, window_bounds = array<i64: 32, 128>}, {pipeline_mode = #tpu.pipeline_mode<synchronous>, transform_indices = @transform_2, window_bounds = array<i64: 2, 128>}, {transform_indices = @transform_3, window_bounds = array<i64: 1, 1, 128>}]} {
    %c0_i32 = arith.constant 0 : i32
    %0 = arith.cmpi eq, %arg1, %c0_i32 : i32
    %1 = arith.extui %0 : i1 to i32
    %c0_i32_0 = arith.constant 0 : i32
    %2 = arith.cmpi ne, %1, %c0_i32_0 : i32
    scf.if %2 {
      %cst_17 = arith.constant 0.000000e+00 : f32
      %21 = vector.broadcast %cst_17 : f32 to vector<1x128xf32>
      %c0_18 = arith.constant 0 : index
      %c0_19 = arith.constant 0 : index
      %22 = vector.load %arg6[%c0_18, %c0_19] : memref<1x128xf32, #tpu.memory_space<vmem>>, vector<1x128xf32>
      tpu.vector_store %arg6[%c0_18, %c0_19], %21 {strides = array<i32>} : memref<1x128xf32, #tpu.memory_space<vmem>>, vector<1x128xf32>,
      %cst_20 = arith.constant 0.000000e+00 : f32
      %23 = vector.broadcast %cst_20 : f32 to vector<1x128xf32>
      %c0_21 = arith.constant 0 : index
      %c0_22 = arith.constant 0 : index
      %24 = vector.load %arg7[%c0_21, %c0_22] : memref<1x128xf32, #tpu.memory_space<vmem>>, vector<1x128xf32>
      tpu.vector_store %arg7[%c0_21, %c0_22], %23 {strides = array<i32>} : memref<1x128xf32, #tpu.memory_space<vmem>>, vector<1x128xf32>,
    } else {
    }
    %c0 = arith.constant 0 : index
    %c0_1 = arith.constant 0 : index
    %c0_2 = arith.constant 0 : index
    %3 = vector.load %arg2[%c0, %c0_1, %c0_2] : memref<1x8x32xf32, #tpu.memory_space<vmem>>, vector<1x8x32xf32>
    %4 = vector.shape_cast %3 : vector<1x8x32xf32> to vector<8x32xf32>
    %c0_3 = arith.constant 0 : index
    %c0_4 = arith.constant 0 : index
    %5 = vector.load %arg3[%c0_3, %c0_4] : memref<32x128xf32, #tpu.memory_space<vmem>>, vector<32x128xf32>
    %cst = arith.constant dense<0.000000e+00> : vector<8x128xf32>
    %6 = tpu.matmul %4, %5, %cst {dimension_numbers = #tpu.dot_dimension_numbers<[1], [0], [0], [1], [0, 0, 1, 1], [], []>} : vector<8x32xf32>, vector<32x128xf32>, vector<8x128xf32> -> vector<8x128xf32>
    %c0_5 = arith.constant 0 : index
    %c0_6 = arith.constant 0 : index
    %7 = vector.load %arg6[%c0_5, %c0_6] : memref<1x128xf32, #tpu.memory_space<vmem>>, vector<1x128xf32>
    %cst_7 = arith.constant dense<0.000000e+00> : vector<128xf32>
    %8 = vector.multi_reduction <add>, %6, %cst_7 [0] : vector<8x128xf32> to vector<128xf32>
    %9 = vector.shape_cast %8 : vector<128xf32> to vector<1x128xf32>
    %10 = arith.addf %7, %9 : vector<1x128xf32>
    %c0_8 = arith.constant 0 : index
    %c0_9 = arith.constant 0 : index
    %11 = vector.load %arg6[%c0_8, %c0_9] : memref<1x128xf32, #tpu.memory_space<vmem>>, vector<1x128xf32>
    tpu.vector_store %arg6[%c0_8, %c0_9], %10 {strides = array<i32>} : memref<1x128xf32, #tpu.memory_space<vmem>>, vector<1x128xf32>,
    %c0_10 = arith.constant 0 : index
    %c0_11 = arith.constant 0 : index
    %12 = vector.load %arg7[%c0_10, %c0_11] : memref<1x128xf32, #tpu.memory_space<vmem>>, vector<1x128xf32>
    %13 = arith.mulf %6, %6 : vector<8x128xf32>
    %cst_12 = arith.constant dense<0.000000e+00> : vector<128xf32>
    %14 = vector.multi_reduction <add>, %13, %cst_12 [0] : vector<8x128xf32> to vector<128xf32>
    %15 = vector.shape_cast %14 : vector<128xf32> to vector<1x128xf32>
    %16 = arith.addf %12, %15 : vector<1x128xf32>
    %c0_13 = arith.constant 0 : index
    %c0_14 = arith.constant 0 : index
    %17 = vector.load %arg7[%c0_13, %c0_14] : memref<1x128xf32, #tpu.memory_space<vmem>>, vector<1x128xf32>
    tpu.vector_store %arg7[%c0_13, %c0_14], %16 {strides = array<i32>} : memref<1x128xf32, #tpu.memory_space<vmem>>, vector<1x128xf32>,
    %c0_i32_15 = arith.constant 0 : i32
    %18 = arith.cmpi eq, %arg1, %c0_i32_15 : i32
    %19 = arith.extui %18 : i1 to i32
    %c0_i32_16 = arith.constant 0 : i32
    %20 = arith.cmpi ne, %19, %c0_i32_16 : i32
    scf.if %20 {
      %c0_17 = arith.constant 0 : index
      %c0_18 = arith.constant 0 : index
      %21 = vector.load %arg4[%c0_17, %c0_18] : memref<2x128xf32, #tpu.memory_space<vmem>>, vector<2x128xf32>
      %22 = vector.extract_strided_slice %21 {offsets = [0, 0], sizes = [1, 128], strides = [1, 1]} : vector<2x128xf32> to vector<1x128xf32>
      %23 = vector.extract_strided_slice %21 {offsets = [1, 0], sizes = [1, 128], strides = [1, 1]} : vector<2x128xf32> to vector<1x128xf32>
      %c0_19 = arith.constant 0 : index
      %c0_20 = arith.constant 0 : index
      %24 = vector.load %arg7[%c0_19, %c0_20] : memref<1x128xf32, #tpu.memory_space<vmem>>, vector<1x128xf32>
      %cst_21 = arith.constant 2.400000e+01 : f32
      %25 = vector.broadcast %cst_21 : f32 to vector<1x128xf32>
      %26 = arith.mulf %25, %24 : vector<1x128xf32>
      %c0_22 = arith.constant 0 : index
      %c0_23 = arith.constant 0 : index
      %27 = vector.load %arg6[%c0_22, %c0_23] : memref<1x128xf32, #tpu.memory_space<vmem>>, vector<1x128xf32>
      %cst_24 = arith.constant 2.000000e+00 : f32
      %28 = vector.broadcast %cst_24 : f32 to vector<1x128xf32>
      %29 = arith.mulf %28, %27 : vector<1x128xf32>
      %30 = arith.mulf %29, %22 : vector<1x128xf32>
      %31 = arith.subf %26, %30 : vector<1x128xf32>
      %cst_25 = arith.constant 8.000000e+00 : f32
      %32 = vector.broadcast %cst_25 : f32 to vector<1x128xf32>
      %33 = arith.mulf %32, %23 : vector<1x128xf32>
      %34 = arith.addf %31, %33 : vector<1x128xf32>
      %35 = tpu.iota {dimensions = array<i32: 1>} : vector<1x128xi32>
      %c16_i32 = arith.constant 16 : i32
      %36 = vector.broadcast %c16_i32 : i32 to vector<1x128xi32>
      %37 = arith.cmpi slt, %35, %36 : vector<1x128xi32>
      %cst_26 = arith.constant 0x7F800000 : f32
      %38 = vector.broadcast %cst_26 : f32 to vector<1x128xf32>
      %39 = arith.select %37, %34, %38 : vector<1x128xi1>, vector<1x128xf32>
      %cst_27 = arith.constant dense<0x7F800000> : vector<1xf32>
      %40 = vector.multi_reduction <minimumf>, %39, %cst_27 [1] : vector<1x128xf32> to vector<1xf32>
      %41 = vector.shape_cast %40 : vector<1xf32> to vector<1x1xf32>
      %42 = vector.broadcast %41 : vector<1x1xf32> to vector<1x128xf32>
      %43 = arith.cmpf oeq, %39, %42 : vector<1x128xf32>
      %c16_i32_28 = arith.constant 16 : i32
      %44 = vector.broadcast %c16_i32_28 : i32 to vector<1x128xi32>
      %45 = arith.select %43, %35, %44 : vector<1x128xi1>, vector<1x128xi32>
      %cst_29 = arith.constant dense<2147483647> : vector<1xi32>
      %46 = vector.multi_reduction <minsi>, %45, %cst_29 [1] : vector<1x128xi32> to vector<1xi32>
      %47 = vector.shape_cast %46 : vector<1xi32> to vector<1x1xi32>
      %48 = vector.shape_cast %47 : vector<1x1xi32> to vector<1x1xi32>
      %49 = vector.broadcast %48 : vector<1x1xi32> to vector<1x128xi32>
      %c0_30 = arith.constant 0 : index
      %c0_31 = arith.constant 0 : index
      %c0_32 = arith.constant 0 : index
      %50 = vector.load %arg5[%c0_30, %c0_31, %c0_32] : memref<1x1x128xi32, #tpu.memory_space<vmem>>, vector<1x1x128xi32>
      %51 = vector.shape_cast %50 : vector<1x1x128xi32> to vector<1x128xi32>
      %52 = vector.shape_cast %49 : vector<1x128xi32> to vector<1x1x128xi32>
      tpu.vector_store %arg5[%c0_30, %c0_31, %c0_32], %52 {strides = array<i32>} : memref<1x1x128xi32, #tpu.memory_space<vmem>>, vector<1x1x128xi32>,
    } else {
    }
    return
  }
  func.func @transform_0(%arg0: i32, %arg1: i32) -> (i32, i32, i32) {
    %c0_i32 = arith.constant 0 : i32
    %c0_i32_0 = arith.constant 0 : i32
    return %arg0, %arg1, %c0_i32 : i32, i32, i32
  }
  func.func @transform_1(%arg0: i32, %arg1: i32) -> (i32, i32) {
    %c0_i32 = arith.constant 0 : i32
    %c0_i32_0 = arith.constant 0 : i32
    %c0_i32_1 = arith.constant 0 : i32
    return %c0_i32, %c0_i32_0 : i32, i32
  }
  func.func @transform_2(%arg0: i32, %arg1: i32) -> (i32, i32) {
    %c0_i32 = arith.constant 0 : i32
    %c0_i32_0 = arith.constant 0 : i32
    %c0_i32_1 = arith.constant 0 : i32
    return %c0_i32, %c0_i32_0 : i32, i32
  }
  func.func @transform_3(%arg0: i32, %arg1: i32) -> (i32, i32, i32) {
    %c0_i32 = arith.constant 0 : i32
    %c0_i32_0 = arith.constant 0 : i32
    %c0_i32_1 = arith.constant 0 : i32
    return %arg0, %c0_i32, %c0_i32_0 : i32, i32, i32
  }
}

</mosaic_0001>

<llo_original>
// kernel: tpu_custom_call.1
$region0: #{tpu_custom_call.1}
  #allocation0 [shape = 'u32[]', space=smem, size = 0x4, offset = 0x4, fixed_abs, tag = 'smem constant byte address 0x4 - core index']
  #allocation1 [shape = 'u32[144,128]{1,0:T(1,128)}', space=vmem, size = 0x12000, scoped, tag = 'internal scratch']
  #allocation2 [shape = 'f32[1,128]{1,0:T(1,128)}', space=vmem, size = 0x200, scoped, tag = 'scratch operand']
  #allocation3 [shape = 'f32[1,128]{1,0:T(1,128)}', space=vmem, size = 0x200, scoped, tag = 'scratch operand']
  %s0 = inlined_call_operand.hbm [shape: f32[2,8,32], index: 0, kind: input, shape index: {}]
  %s1 = inlined_call_operand.hbm [shape: f32[32,128], index: 1, kind: input, shape index: {}]
  %s2 = inlined_call_operand.vmem [shape: f32[2,128], index: 2, kind: input, shape index: {}]
  %s3 = inlined_call_operand.hbm [shape: s32[2,1,128], index: 3, kind: output, shape index: {}]
  %s4 = sld [smem:[#allocation0]]
  $region61: #{tpu_custom_call.1} parent=0
    _
  %s6 = ssub.s32 1, %s4
  %s7 = scalar_select 0, %s6, %s4
  $region1: #{tpu_custom_call.1} parent=0
    #allocation4 [shape = 'u8[8192]{0}', space=vmem, size = 0x2000, scoped, tag = 'input window, operand 0']
    #allocation5 [shape = 's32[2]{0}', space=sflag, size = 0x8, scoped, tag = 'scoped memory for tpu_custom_call.1']
    #allocation6 [shape = 's32[2]{0}', space=sflag, size = 0x8, scoped, tag = 'scoped memory for tpu_custom_call.1']
    #allocation7 [shape = 'u8[16384]{0}', space=vmem, size = 0x4000, scoped, tag = 'input window, operand 1, single buffered']
    #allocation8 [shape = 's32[1]{0}', space=sflag, size = 0x4, scoped, tag = 'scoped memory for tpu_custom_call.1']
    #allocation9 [shape = 'u8[1024]{0}', space=vmem, size = 0x400, scoped, tag = 'output window, operand 0']
    %8 = vsyncpa [#allocation5], 0
    %s9 = scalar_lea.sflag [#allocation5], 1
    %10 = vsyncpa %s9, 0
    %11 = vsyncpa [#allocation8], 0
    %12 = vsyncpa [#allocation6], 0
    %s13 = scalar_lea.sflag [#allocation6], 1
    %14 = vsyncpa %s13, 0
    loop: start=0, step=1, limit=4
    $region2: #{tpu_custom_call.1} parent=1 // loop_pre_header
      _
    $region3: #{tpu_custom_call.1} parent=1 // loop_header
      %s16 = sphi 0, %s20
      %p17 = scmp.ge.s32.totalorder %s16, 4
      %s23 = sphi 0, %s35
      %s24 = sphi 0, %s31
      %s25 = sphi 0, %s23
      %s26 = sphi 0, %s24
      %s27 = sphi 0, %s25
      %s28 = sphi 0, %s26
      %s40 = sphi 0, %s42
      %s43 = sphi 0, %s40
      %s44 = sphi 0, %s43
      %s60 = sphi 0, %s44
      %s64 = sphi 0, %s64
      %s66 = sphi 0, %s64
      %s67 = sphi 0, %s66
      %s81 = sphi 0, %s67
      %s85 = sphi 0, %s85
      %s87 = sphi 0, %s85
      %s88 = sphi 0, %s87
      %s102 = sphi 0, %s88
      %s108 = sphi 0, %s110
      %s111 = sphi 0, %s108
      %s112 = sphi 0, %s111
      %s128 = sphi 0, %s112
    $region4: #{tpu_custom_call.1} parent=1 // loop_header_branch
      %19 = sbr.rel (%p17) target = $region8
    $region5: #{tpu_custom_call.1} parent=1 // loop_body
      %s21 = ssub.s32 %s16, 1
      %s22 = ssub.s32 %s16, 2
      %s29 = sadd.s32 1, %s24
      %p30 = scmp.ge.s32.totalorder %s29, 1
      %s31 = scalar_select %p30, 0, %s29
      %s32 = sadd.s32 1, %s23
      %s33 = scalar_select %p30, %s32, %s23
      %p34 = scmp.ge.s32.totalorder %s33, 2
      %s35 = scalar_select %p34, 0, %s33
      %s36 = ssub.s32 %s23, %s35
      %s37 = ssub.s32 %s24, %s31
      %s38 = sor.u32 %s36, %s37
      %p39 = scmp.eq.s32.totalorder %s38, 0
      %s41 = sadd.s32 %s40, 1
      %s42 = scalar_select %p39, %s40, %s41
      %p45 = pneg %p39
      %p46 = scmp.eq.s32.totalorder %s16, 1
      %p47 = por %p45, %p46
      %p48 = scmp.ne.s32.totalorder %s40, %s43
      %p49 = scmp.eq.s32.totalorder %s16, 0
      %p50 = por %p48, %p49
      %p51 = scmp.ne.s32.totalorder %s40, %s43
      %p52 = scmp.eq.s32.totalorder %s21, 1
      %p53 = por %p51, %p52
      %p54 = scmp.ne.s32.totalorder %s43, %s44
      %p55 = scmp.eq.s32.totalorder %s21, 0
      %p56 = por %p54, %p55
      %p57 = scmp.ne.s32.totalorder %s43, %s44
      %p58 = scmp.eq.s32.totalorder %s22, 1
      %p59 = por %p57, %p58
      %p61 = scmp.ne.s32.totalorder %s44, %s60
      %p62 = scmp.eq.s32.totalorder %s22, 0
      %p63 = por %p61, %p62
      %s65 = sadd.s32 %s64, 1
      %p68 = scmp.eq.s32.totalorder %s16, 1
      %p69 = scmp.ne.s32.totalorder %s64, %s66
      %p70 = scmp.eq.s32.totalorder %s16, 0
      %p71 = por %p69, %p70
      %p72 = scmp.ne.s32.totalorder %s64, %s66
      %p73 = scmp.eq.s32.totalorder %s21, 1
      %p74 = por %p72, %p73
      %p75 = scmp.ne.s32.totalorder %s66, %s67
      %p76 = scmp.eq.s32.totalorder %s21, 0
      %p77 = por %p75, %p76
      %p78 = scmp.ne.s32.totalorder %s66, %s67
      %p79 = scmp.eq.s32.totalorder %s22, 1
      %p80 = por %p78, %p79
      %p82 = scmp.ne.s32.totalorder %s67, %s81
      %p83 = scmp.eq.s32.totalorder %s22, 0
      %p84 = por %p82, %p83
      %s86 = sadd.s32 %s85, 1
      %p89 = scmp.eq.s32.totalorder %s16, 1
      %p90 = scmp.ne.s32.totalorder %s85, %s87
      %p91 = scmp.eq.s32.totalorder %s16, 0
      %p92 = por %p90, %p91
      %p93 = scmp.ne.s32.totalorder %s85, %s87
      %p94 = scmp.eq.s32.totalorder %s21, 1
      %p95 = por %p93, %p94
      %p96 = scmp.ne.s32.totalorder %s87, %s88
      %p97 = scmp.eq.s32.totalorder %s21, 0
      %p98 = por %p96, %p97
      %p99 = scmp.ne.s32.totalorder %s87, %s88
      %p100 = scmp.eq.s32.totalorder %s22, 1
      %p101 = por %p99, %p100
      %p103 = scmp.ne.s32.totalorder %s88, %s102
      %p104 = scmp.eq.s32.totalorder %s22, 0
      %p105 = por %p103, %p104
      %s106 = ssub.s32 %s23, %s35
      %p107 = scmp.eq.s32.totalorder %s106, 0
      %s109 = sadd.s32 %s108, 1
      %s110 = scalar_select %p107, %s108, %s109
      %p113 = pneg %p107
      %p114 = scmp.eq.s32.totalorder %s16, 1
      %p115 = por %p113, %p114
      %p116 = scmp.ne.s32.totalorder %s108, %s111
      %p117 = scmp.eq.s32.totalorder %s16, 0
      %p118 = por %p116, %p117
      %p119 = scmp.ne.s32.totalorder %s108, %s111
      %p120 = scmp.eq.s32.totalorder %s21, 1
      %p121 = por %p119, %p120
      %p122 = scmp.ne.s32.totalorder %s111, %s112
      %p123 = scmp.eq.s32.totalorder %s21, 0
      %p124 = por %p122, %p123
      %p125 = scmp.ne.s32.totalorder %s111, %s112
      %p126 = scmp.eq.s32.totalorder %s22, 1
      %p127 = por %p125, %p126
      %p129 = scmp.ne.s32.totalorder %s112, %s128
      %p130 = scmp.eq.s32.totalorder %s22, 0
      %p131 = por %p129, %p130
      %p132 = scmp.le.s32.totalorder 1, %s16
      %p133 = scmp.lt.s32.totalorder %s16, 3
      %p134 = pnand %p132, %p133
      %p135 = pneg %p134
      // Predicated region
      $region9: #{tpu_custom_call.1} parent=5 // pred_check
        _
      $region10: #{tpu_custom_call.1} parent=5 // pred_check_branch
        %137 = sbr.rel (%p134) target = $region12
      $region11: #{tpu_custom_call.1} parent=5 // pred_region
        %s138 = ssub.s32 %s16, 1
        // Predicated region
        $region13: #{tpu_custom_call.1} parent=11 // pred_check
          %p139 = pneg %p77
        $region14: #{tpu_custom_call.1} parent=11 // pred_check_branch
          %141 = sbr.rel (%p139) target = $region16
        $region15: #{tpu_custom_call.1} parent=11 // pred_region
          %s143 = ssub.s32 512, 512
          %144 = vsyncadd [#allocation8], %s143
          %s145 = sshll.u32 [#allocation7], 4
          %s146 = int_to_ptr.vmem [resolvable:$true] %s145
          %151 = dma.hbm_to_vmem [thread:$0]  %s1, 512, %s146, [#allocation8], 128, 128, 8
        $region16: #{tpu_custom_call.1} parent=11 // pred_fallthru
          _
        // Predicated region
        $region17: #{tpu_custom_call.1} parent=11 // pred_check
          %p152 = pneg %p98
        $region18: #{tpu_custom_call.1} parent=11 // pred_check_branch
          %154 = sbr.rel (%p152) target = $region20
        $region19: #{tpu_custom_call.1} parent=11 // pred_region
          _
        $region20: #{tpu_custom_call.1} parent=11 // pred_fallthru
          _
      $region12: #{tpu_custom_call.1} parent=5 // pred_fallthru
        _
      %p155 = scmp.lt.s32.totalorder %s16, 2
      // Predicated region
      $region21: #{tpu_custom_call.1} parent=5 // pred_check
        %p156 = pneg %p155
      $region22: #{tpu_custom_call.1} parent=5 // pred_check_branch
        %158 = sbr.rel (%p156) target = $region24
      $region23: #{tpu_custom_call.1} parent=5 // pred_region
        // Predicated region
        $region25: #{tpu_custom_call.1} parent=23 // pred_check
          %p159 = pneg %p50
        $region26: #{tpu_custom_call.1} parent=23 // pred_check_branch
          %161 = sbr.rel (%p159) target = $region28
        $region27: #{tpu_custom_call.1} parent=23 // pred_region
          %s162 = sand.u32 %s40, 1
          %s163 = scalar_lea.sflag [#allocation5], %s162
          %s164 = sand.u32 %s40, 1
          %s165 = smul.addr %s164, 8
          %s166 = scalar_lea.vmem [#allocation4], %s165
          %s168 = ssub.s32 128, 128
          %169 = vsyncadd %s163, %s168
          %s170 = sadd.s32 %s24, %s23
          %s171 = smul.addr %s170, 128
          %s172 = scalar_lea.hbm %s0, %s171
          %s174 = sshll.u32 %s166, 4
          %s175 = int_to_ptr.vmem [resolvable:$true] %s174
          %177 = dma.hbm_to_vmem [thread:$0]  %s172, 128, %s175, %s163
        $region28: #{tpu_custom_call.1} parent=23 // pred_fallthru
          _
      $region24: #{tpu_custom_call.1} parent=5 // pred_fallthru
        _
      %p178 = scmp.le.s32.totalorder 1, %s16
      %p179 = scmp.lt.s32.totalorder %s16, 3
      %p180 = pnand %p178, %p179
      %p181 = pneg %p180
      // Predicated region
      $region29: #{tpu_custom_call.1} parent=5 // pred_check
        _
      $region30: #{tpu_custom_call.1} parent=5 // pred_check_branch
        %183 = sbr.rel (%p180) target = $region32
      $region31: #{tpu_custom_call.1} parent=5 // pred_region
        %s184 = ssub.s32 %s16, 1
        %s185 = sand.u32 %s43, 1
        %s186 = scalar_lea.sflag [#allocation5], %s185
        %s187 = sand.u32 %s43, 1
        %s188 = smul.addr %s187, 8
        %s189 = scalar_lea.vmem [#allocation4], %s188
        // Predicated region
        $region33: #{tpu_custom_call.1} parent=31 // pred_check
          %p190 = pneg %p56
        $region34: #{tpu_custom_call.1} parent=31 // pred_check_branch
          %192 = sbr.rel (%p190) target = $region36
        $region35: #{tpu_custom_call.1} parent=31 // pred_region
          %193 = dma.done %s186, 128
        $region36: #{tpu_custom_call.1} parent=31 // pred_fallthru
          _
        // Predicated region
        $region37: #{tpu_custom_call.1} parent=31 // pred_check
          %p194 = pneg %p77
        $region38: #{tpu_custom_call.1} parent=31 // pred_check_branch
          %196 = sbr.rel (%p194) target = $region40
        $region39: #{tpu_custom_call.1} parent=31 // pred_region
          %197 = dma.done [#allocation8], 512
        $region40: #{tpu_custom_call.1} parent=31 // pred_fallthru
          _
        %s198 = sand.u32 %s43, 1
        %s199 = scalar_lea.sflag [#allocation5], %s198
        %s200 = sand.u32 %s43, 1
        %s201 = smul.addr %s200, 8
        %s202 = scalar_lea.vmem [#allocation4], %s201
        %p203 = pneg %p56
        %p204 = pneg %p53
        %p205 = pneg %p77
        %p206 = pneg %p74
        %p207 = pneg %p98
        %p208 = pneg %p95
        %p209 = pneg %p124
        %p210 = pneg %p121
        %s211 = sand.u32 %s111, 1
        %s212 = scalar_lea.sflag [#allocation6], %s211
        %s213 = sand.u32 %s111, 1
        %s214 = scalar_lea.vmem [#allocation9], %s213
        %p215 = scmp.eq.s32.totalorder %s26, 0
        // Predicated region
        $region41: #{tpu_custom_call.1} parent=31 // pred_check
          %p216 = pneg %p215
        $region42: #{tpu_custom_call.1} parent=31 // pred_check_branch
          %218 = sbr.rel (%p216) target = $region44
        $region43: #{tpu_custom_call.1} parent=31 // pred_region
          %219 = vst [vmem:[#allocation2] sm:$0x1] 0.0
          %220 = vst [vmem:[#allocation3] sm:$0x1] 0.0
        $region44: #{tpu_custom_call.1} parent=31 // pred_fallthru
          _
        %v221 = vld [vmem:[%s189] sm:$0xff]
        %v222 = vld [vmem:[#allocation7] sm:$0xff]
        %v223 = vld [vmem:[#allocation7 + $0x8] sm:$0xff]
        %v224 = vld [vmem:[#allocation7 + $0x10] sm:$0xff]
        %v225 = vld [vmem:[#allocation7 + $0x18] sm:$0xff]
        %vm226 = vcmask 261120
        %v228 = vsel %vm226, %v221, 0
        %230 = vmatprep.subr.mxu0 0.0
        %231 = vmatpush1.msra.mxu0 %v222
        %232 = vmatprep.subr.mxu0 0.0
        %233 = vmatpush1.msra.mxu0 %v223
        %234 = vmatprep.subr.mxu0 0.0
        %235 = vmatpush1.msra.mxu0 %v224
        %236 = vmatprep.subr.mxu0 0.0
        %237 = vmatpush1.msra.mxu0 %v225
        %238 = vmatprep.subr.mxu0 0.0
        %239 = vmatpush1.msra.mxu0 0.0
        %240 = vmatprep.subr.mxu0 0.0
        %241 = vmatpush1.msra.mxu0 0.0
        %242 = vmatprep.subr.mxu0 0.0
        %243 = vmatpush1.msra.mxu0 0.0
        %244 = vmatprep.subr.mxu0 0.0
        %245 = vmatpush1.msra.mxu0 0.0
        %246 = vmatprep.subr.mxu0 0.0
        %247 = vmatpush1.msra.mxu0 0.0
        %248 = vmatprep.subr.mxu0 0.0
        %249 = vmatpush1.msra.mxu0 0.0
        %250 = vmatprep.subr.mxu0 0.0
        %251 = vmatpush1.msra.mxu0 0.0
        %252 = vmatprep.subr.mxu0 0.0
        %253 = vmatpush1.msra.mxu0 0.0
        %254 = vmatprep.subr.mxu0 0.0
        %255 = vmatpush1.msra.mxu0 0.0
        %256 = vmatprep.subr.mxu0 0.0
        %257 = vmatpush1.msra.mxu0 0.0
        %258 = vmatprep.subr.mxu0 0.0
        %259 = vmatpush1.msra.mxu0 0.0
        %260 = vmatprep.subr.mxu0 0.0
        %261 = vmatpush1.msra.mxu0 0.0
        %262 = vmatprep.subr.mxu0 0.0
        %263 = vmatpush1.msra.mxu0 0.0
        %264 = vmatprep.subr.mxu0 0.0
        %265 = vmatpush1.msra.mxu0 0.0
        %266 = vmatprep.subr.mxu0 0.0
        %267 = vmatpush1.msra.mxu0 0.0
        %268 = vmatprep.subr.mxu0 0.0
        %269 = vmatpush1.msra.mxu0 0.0
        %270 = vmatprep.subr.mxu0 0.0
        %271 = vmatpush1.msra.mxu0 0.0
        %272 = vmatprep.subr.mxu0 0.0
        %273 = vmatpush1.msra.mxu0 0.0
        %274 = vmatprep.subr.mxu0 0.0
        %275 = vmatpush1.msra.mxu0 0.0
        %276 = vmatprep.subr.mxu0 0.0
        %277 = vmatpush1.msra.mxu0 0.0
        %278 = vmatprep.subr.mxu0 0.0
        %279 = vmatpush1.msra.mxu0 0.0
        %280 = vmatprep.subr.mxu0 0.0
        %281 = vmatpush1.msra.mxu0 0.0
        %282 = vmatprep.subr.mxu0 0.0
        %283 = vmatpush1.msra.mxu0 0.0
        %284 = vmatprep.subr.mxu0 0.0
        %285 = vmatpush1.msra.mxu0 0.0
        %286 = vmatprep.subr.mxu0 0.0
        %287 = vmatpush1.msra.mxu0 0.0
        %288 = vmatprep.subr.mxu0 0.0
        %289 = vmatpush1.msra.mxu0 0.0
        %290 = vmatprep.subr.mxu0 0.0
        %291 = vmatpush1.msra.mxu0 0.0
        %292 = vmatprep.subr.mxu0 0.0
        %293 = vmatpush1.msra.mxu0 0.0
        %294 = vmatprep.mubr.f32.mxu0 0.0
        %295 = vmatmul.mubr.f32.gmra.mrb[0].mxu0 %v228
        %v296 = vpop.f32.mrb[0].mxu0
        %v297 = vadd.f32 0.0, %v296
        %v298 = vpop.f32.mrb[0].mxu0
        %299 = vdwg.mxu0
        %v300 = vld [vmem:[#allocation2] sm:$0x1]
        %v301 = vrot.slane %v297, 4
        %v302 = vadd.f32 %v297, %v301
        %v303 = vrot.slane %v302, 2
        %v304 = vadd.f32 %v302, %v303
        %v305 = vrot.slane %v304, 1
        %v306 = vadd.f32 %v304, %v305
        %v307 = vadd.f32 %v300, %v306
        %308 = vst [vmem:[#allocation2] sm:$0x1] %v307
        %v309 = vld [vmem:[#allocation3] sm:$0x1]
        %v310 = vmul.f32 %v297, %v297
        %v311 = vrot.slane %v310, 4
        %v312 = vadd.f32 %v310, %v311
        %v313 = vrot.slane %v312, 2
        %v314 = vadd.f32 %v312, %v313
        %v315 = vrot.slane %v314, 1
        %v316 = vadd.f32 %v314, %v315
        %v317 = vadd.f32 %v309, %v316
        %318 = vst [vmem:[#allocation3] sm:$0x1] %v317
        // Predicated region
        $region45: #{tpu_custom_call.1} parent=31 // pred_check
          %p319 = pneg %p215
        $region46: #{tpu_custom_call.1} parent=31 // pred_check_branch
          %321 = sbr.rel (%p319) target = $region48
        $region47: #{tpu_custom_call.1} parent=31 // pred_region
          %v322 = vld [vmem:[%s2] sm:$0x3]
          %v323 = vld [vmem:[#allocation3] sm:$0x1]
          %v324 = vmul.f32 %v323, 24.0
          %v325 = vld [vmem:[#allocation2] sm:$0x1]
          %v326 = vmul.f32 %v325, 2.0
          %v327 = vmul.f32 %v326, %v322
          %v328 = vsub.f32 %v324, %v327
          %v329 = vmul.f32 %v322, 8.0
          %v332 = vunpack.c.l.s4 1966171168
          %v333 = vunpack.c.0.s8 %v332
          %v334 = vlaneseq
          %v335 = vshrl.u32 %v334, 7
          %v336 = vsub.s32 %v333, %v335
          %v337 = vrot.slane %v329, %v336
          %v338 = vcombine.high %v337, %v337
          %v340 = vunpack.c.l.s4 1966171168
          %v341 = vunpack.c.0.s8 %v340
          %v342 = vlaneseq
          %v343 = vshrl.u32 %v342, 7
          %v344 = vsub.s32 %v341, %v343
          %v345 = vrot.slane %v338, %v344
          %v347 = vadd.f32 %v328, %v345
          %v348 = vlaneseq
          %v349 = vand.u32 %v348, 127
          %vm350 = vcmp.lt.s32.totalorder %v349, 16
          %v351 = vsel %vm350, %v347, inf
          %vm352 = vcmask 1040384
          %v353 = vsel %vm352, %v351, inf
          %354 = vmin.xlane.f32.xlu0 %v353
          %v355 = vpop.xlane.xlu0 %354
          %vm356 = vcmp.eq.f32.partialorder %v351, %v355
          %v357 = vsel %vm356, %v349, 16
          %v358 = vsel %vm352, %v357, 2147483647
          %v359 = vand.u32 %v358, 65535
          %v360 = vshra.s32 %v358, 16
          %v361 = vcvt.s32.f32 %v359
          %v362 = vcvt.s32.f32 %v360
          %363 = vmin.xlane.f32.xlu0 %v362
          %v364 = vpop.xlane.xlu0 %363
          %vm365 = vcmp.eq.f32.partialorder %v362, %v364
          %v366 = vsel %vm365, %v361, inf
          %367 = vmin.xlane.f32.xlu0 %v366
          %v368 = vpop.xlane.xlu0 %367
          %v369 = vcvt.f32.s32 %v368
          %v370 = vcvt.f32.s32 %v364
          %v371 = vshll.u32 %v370, 16
          %v372 = vadd.s32 %v371, %v369
          %373 = vst [vmem:[%s214] sm:$0x1] %v372
        $region48: #{tpu_custom_call.1} parent=31 // pred_fallthru
          _
        %s374 = sand.u32 %s111, 1
        %s375 = scalar_lea.sflag [#allocation6], %s374
        %s376 = sand.u32 %s111, 1
        %s377 = scalar_lea.vmem [#allocation9], %s376
        // Predicated region
        $region49: #{tpu_custom_call.1} parent=31 // pred_check
          %p378 = pneg %p121
        $region50: #{tpu_custom_call.1} parent=31 // pred_check_branch
          %380 = sbr.rel (%p378) target = $region52
        $region51: #{tpu_custom_call.1} parent=31 // pred_region
          %s382 = ssub.s32 16, 16
          %383 = vsyncadd %s375, %s382
          %s384 = smul.addr %s25, 16
          %s385 = scalar_lea.hbm %s3, %s384
          %s387 = sshll.u32 %s377, 4
          %s388 = int_to_ptr.vmem [resolvable:$true] %s387
          %390 = dma.vmem_to_hbm [thread:$0]  %s388, 16, %s385, %s375
        $region52: #{tpu_custom_call.1} parent=31 // pred_fallthru
          _
      $region32: #{tpu_custom_call.1} parent=5 // pred_fallthru
        _
      %p391 = scmp.le.s32.totalorder 2, %s16
      // Predicated region
      $region53: #{tpu_custom_call.1} parent=5 // pred_check
        %p392 = pneg %p391
      $region54: #{tpu_custom_call.1} parent=5 // pred_check_branch
        %394 = sbr.rel (%p392) target = $region56
      $region55: #{tpu_custom_call.1} parent=5 // pred_region
        %s395 = ssub.s32 %s16, 2
        // Predicated region
        $region57: #{tpu_custom_call.1} parent=55 // pred_check
          %p396 = pneg %p127
        $region58: #{tpu_custom_call.1} parent=55 // pred_check_branch
          %398 = sbr.rel (%p396) target = $region60
        $region59: #{tpu_custom_call.1} parent=55 // pred_region
          %s399 = sand.u32 %s112, 1
          %s400 = scalar_lea.sflag [#allocation6], %s399
          %s401 = sand.u32 %s112, 1
          %s402 = scalar_lea.vmem [#allocation9], %s401
          %403 = dma.done %s400, 16
        $region60: #{tpu_custom_call.1} parent=55 // pred_fallthru
          _
      $region56: #{tpu_custom_call.1} parent=5 // pred_fallthru
        _
    $region6: #{tpu_custom_call.1} parent=1 // loop_footer
      %s20 = sadd.s32 1, %s16
    $region7: #{tpu_custom_call.1} parent=1 // loop_footer_branch
      %15 = sbr.rel target = $region3
    $region8: #{tpu_custom_call.1} parent=1 // loop_exit
      _
    %404 = vsyncpa [#allocation5], 1
    %s405 = scalar_lea.sflag [#allocation5], 1
    %406 = vsyncpa %s405, 1
    %407 = vsyncpa [#allocation8], 1
    %408 = vsyncpa [#allocation6], 1
    %s409 = scalar_lea.sflag [#allocation6], 1
    %410 = vsyncpa %s409, 1

// kernel: tpu_custom_call.1
$region0: #{tpu_custom_call.1}
  #allocation0 [shape = 'u32[]', space=smem, size = 0x4, offset = 0x4, fixed_abs, tag = 'smem constant byte address 0x4 - core index']
  #allocation1 [shape = 'u32[144,128]{1,0:T(1,128)}', space=vmem, size = 0x12000, scoped, tag = 'internal scratch']
  #allocation2 [shape = 'f32[1,128]{1,0:T(1,128)}', space=vmem, size = 0x200, scoped, tag = 'scratch operand']
  #allocation3 [shape = 'f32[1,128]{1,0:T(1,128)}', space=vmem, size = 0x200, scoped, tag = 'scratch operand']
  %s0 = inlined_call_operand.hbm [shape: f32[2,8,32], index: 0, kind: input, shape index: {}]
  %s1 = inlined_call_operand.hbm [shape: f32[32,128], index: 1, kind: input, shape index: {}]
  %s2 = inlined_call_operand.vmem [shape: f32[2,128], index: 2, kind: input, shape index: {}]
  %s3 = inlined_call_operand.hbm [shape: s32[2,1,128], index: 3, kind: output, shape index: {}]
  %s4 = sld [smem:[#allocation0]]
  $region61: #{tpu_custom_call.1} parent=0
    _
  %s6 = ssub.s32 1, %s4
  %s7 = scalar_select 0, %s6, %s4
  $region1: #{tpu_custom_call.1} parent=0
    #allocation4 [shape = 'u8[8192]{0}', space=vmem, size = 0x2000, scoped, tag = 'input window, operand 0']
    #allocation5 [shape = 's32[2]{0}', space=sflag, size = 0x8, scoped, tag = 'scoped memory for tpu_custom_call.1']
    #allocation6 [shape = 's32[2]{0}', space=sflag, size = 0x8, scoped, tag = 'scoped memory for tpu_custom_call.1']
    #allocation7 [shape = 'u8[16384]{0}', space=vmem, size = 0x4000, scoped, tag = 'input window, operand 1, single buffered']
    #allocation8 [shape = 's32[1]{0}', space=sflag, size = 0x4, scoped, tag = 'scoped memory for tpu_custom_call.1']
    #allocation9 [shape = 'u8[1024]{0}', space=vmem, size = 0x400, scoped, tag = 'output window, operand 0']
    %8 = vsyncpa [#allocation5], 0
    %s9 = scalar_lea.sflag [#allocation5], 1
    %10 = vsyncpa %s9, 0
    %11 = vsyncpa [#allocation8], 0
    %12 = vsyncpa [#allocation6], 0
    %s13 = scalar_lea.sflag [#allocation6], 1
    %14 = vsyncpa %s13, 0
    loop: start=0, step=1, limit=4
    $region2: #{tpu_custom_call.1} parent=1 // loop_pre_header
      _
    $region3: #{tpu_custom_call.1} parent=1 // loop_header
      %s16 = sphi 0, %s20
      %p17 = scmp.ge.s32.totalorder %s16, 4
      %s23 = sphi 0, %s35
      %s24 = sphi 0, %s31
      %s25 = sphi 0, %s23
      %s26 = sphi 0, %s24
      %s27 = sphi 0, %s25
      %s28 = sphi 0, %s26
      %s40 = sphi 0, %s42
      %s43 = sphi 0, %s40
      %s44 = sphi 0, %s43
      %s60 = sphi 0, %s44
      %s64 = sphi 0, %s64
      %s66 = sphi 0, %s64
      %s67 = sphi 0, %s66
      %s81 = sphi 0, %s67
      %s85 = sphi 0, %s85
      %s87 = sphi 0, %s85
      %s88 = sphi 0, %s87
      %s102 = sphi 0, %s88
      %s108 = sphi 0, %s110
      %s111 = sphi 0, %s108
      %s112 = sphi 0, %s111
      %s128 = sphi 0, %s112
    $region4: #{tpu_custom_call.1} parent=1 // loop_header_branch
      %19 = sbr.rel (%p17) target = $region8
    $region5: #{tpu_custom_call.1} parent=1 // loop_body
      %s21 = ssub.s32 %s16, 1
      %s22 = ssub.s32 %s16, 2
      %s29 = sadd.s32 1, %s24
      %p30 = scmp.ge.s32.totalorder %s29, 1
      %s31 = scalar_select %p30, 0, %s29
      %s32 = sadd.s32 1, %s23
      %s33 = scalar_select %p30, %s32, %s23
      %p34 = scmp.ge.s32.totalorder %s33, 2
      %s35 = scalar_select %p34, 0, %s33
      %s36 = ssub.s32 %s23, %s35
      %s37 = ssub.s32 %s24, %s31
      %s38 = sor.u32 %s36, %s37
      %p39 = scmp.eq.s32.totalorder %s38, 0
      %s41 = sadd.s32 %s40, 1
      %s42 = scalar_select %p39, %s40, %s41
      %p45 = pneg %p39
      %p46 = scmp.eq.s32.totalorder %s16, 1
      %p47 = por %p45, %p46
      %p48 = scmp.ne.s32.totalorder %s40, %s43
      %p49 = scmp.eq.s32.totalorder %s16, 0
      %p50 = por %p48, %p49
      %p51 = scmp.ne.s32.totalorder %s40, %s43
      %p52 = scmp.eq.s32.totalorder %s21, 1
      %p53 = por %p51, %p52
      %p54 = scmp.ne.s32.totalorder %s43, %s44
      %p55 = scmp.eq.s32.totalorder %s21, 0
      %p56 = por %p54, %p55
      %p57 = scmp.ne.s32.totalorder %s43, %s44
      %p58 = scmp.eq.s32.totalorder %s22, 1
      %p59 = por %p57, %p58
      %p61 = scmp.ne.s32.totalorder %s44, %s60
      %p62 = scmp.eq.s32.totalorder %s22, 0
      %p63 = por %p61, %p62
      %s65 = sadd.s32 %s64, 1
      %p68 = scmp.eq.s32.totalorder %s16, 1
      %p69 = scmp.ne.s32.totalorder %s64, %s66
      %p70 = scmp.eq.s32.totalorder %s16, 0
      %p71 = por %p69, %p70
      %p72 = scmp.ne.s32.totalorder %s64, %s66
      %p73 = scmp.eq.s32.totalorder %s21, 1
      %p74 = por %p72, %p73
      %p75 = scmp.ne.s32.totalorder %s66, %s67
      %p76 = scmp.eq.s32.totalorder %s21, 0
      %p77 = por %p75, %p76
      %p78 = scmp.ne.s32.totalorder %s66, %s67
      %p79 = scmp.eq.s32.totalorder %s22, 1
      %p80 = por %p78, %p79
      %p82 = scmp.ne.s32.totalorder %s67, %s81
      %p83 = scmp.eq.s32.totalorder %s22, 0
      %p84 = por %p82, %p83
      %s86 = sadd.s32 %s85, 1
      %p89 = scmp.eq.s32.totalorder %s16, 1
      %p90 = scmp.ne.s32.totalorder %s85, %s87
      %p91 = scmp.eq.s32.totalorder %s16, 0
      %p92 = por %p90, %p91
      %p93 = scmp.ne.s32.totalorder %s85, %s87
      %p94 = scmp.eq.s32.totalorder %s21, 1
      %p95 = por %p93, %p94
      %p96 = scmp.ne.s32.totalorder %s87, %s88
      %p97 = scmp.eq.s32.totalorder %s21, 0
      %p98 = por %p96, %p97
      %p99 = scmp.ne.s32.totalorder %s87, %s88
      %p100 = scmp.eq.s32.totalorder %s22, 1
      %p101 = por %p99, %p100
      %p103 = scmp.ne.s32.totalorder %s88, %s102
      %p104 = scmp.eq.s32.totalorder %s22, 0
      %p105 = por %p103, %p104
      %s106 = ssub.s32 %s23, %s35
      %p107 = scmp.eq.s32.totalorder %s106, 0
      %s109 = sadd.s32 %s108, 1
      %s110 = scalar_select %p107, %s108, %s109
      %p113 = pneg %p107
      %p114 = scmp.eq.s32.totalorder %s16, 1
      %p115 = por %p113, %p114
      %p116 = scmp.ne.s32.totalorder %s108, %s111
      %p117 = scmp.eq.s32.totalorder %s16, 0
      %p118 = por %p116, %p117
      %p119 = scmp.ne.s32.totalorder %s108, %s111
      %p120 = scmp.eq.s32.totalorder %s21, 1
      %p121 = por %p119, %p120
      %p122 = scmp.ne.s32.totalorder %s111, %s112
      %p123 = scmp.eq.s32.totalorder %s21, 0
      %p124 = por %p122, %p123
      %p125 = scmp.ne.s32.totalorder %s111, %s112
      %p126 = scmp.eq.s32.totalorder %s22, 1
      %p127 = por %p125, %p126
      %p129 = scmp.ne.s32.totalorder %s112, %s128
      %p130 = scmp.eq.s32.totalorder %s22, 0
      %p131 = por %p129, %p130
      %p132 = scmp.le.s32.totalorder 1, %s16
      %p133 = scmp.lt.s32.totalorder %s16, 3
      %p134 = pnand %p132, %p133
      %p135 = pneg %p134
      // Predicated region
      $region9: #{tpu_custom_call.1} parent=5 // pred_check
        _
      $region10: #{tpu_custom_call.1} parent=5 // pred_check_branch
        %137 = sbr.rel (%p134) target = $region12
      $region11: #{tpu_custom_call.1} parent=5 // pred_region
        %s138 = ssub.s32 %s16, 1
        // Predicated region
        $region13: #{tpu_custom_call.1} parent=11 // pred_check
          %p139 = pneg %p77
        $region14: #{tpu_custom_call.1} parent=11 // pred_check_branch
          %141 = sbr.rel (%p139) target = $region16
        $region15: #{tpu_custom_call.1} parent=11 // pred_region
          %s143 = ssub.s32 512, 512
          %144 = vsyncadd [#allocation8], %s143
          %s145 = sshll.u32 [#allocation7], 4
          %s146 = int_to_ptr.vmem [resolvable:$true] %s145
          %151 = dma.hbm_to_vmem [thread:$0]  %s1, 512, %s146, [#allocation8], 128, 128, 8
        $region16: #{tpu_custom_call.1} parent=11 // pred_fallthru
          _
        // Predicated region
        $region17: #{tpu_custom_call.1} parent=11 // pred_check
          %p152 = pneg %p98
        $region18: #{tpu_custom_call.1} parent=11 // pred_check_branch
          %154 = sbr.rel (%p152) target = $region20
        $region19: #{tpu_custom_call.1} parent=11 // pred_region
          _
        $region20: #{tpu_custom_call.1} parent=11 // pred_fallthru
          _
      $region12: #{tpu_custom_call.1} parent=5 // pred_fallthru
        _
      %p155 = scmp.lt.s32.totalorder %s16, 2
      // Predicated region
      $region21: #{tpu_custom_call.1} parent=5 // pred_check
        %p156 = pneg %p155
      $region22: #{tpu_custom_call.1} parent=5 // pred_check_branch
        %158 = sbr.rel (%p156) target = $region24
      $region23: #{tpu_custom_call.1} parent=5 // pred_region
        // Predicated region
        $region25: #{tpu_custom_call.1} parent=23 // pred_check
          %p159 = pneg %p50
        $region26: #{tpu_custom_call.1} parent=23 // pred_check_branch
          %161 = sbr.rel (%p159) target = $region28
        $region27: #{tpu_custom_call.1} parent=23 // pred_region
          %s162 = sand.u32 %s40, 1
          %s163 = scalar_lea.sflag [#allocation5], %s162
          %s164 = sand.u32 %s40, 1
          %s165 = smul.addr %s164, 8
          %s166 = scalar_lea.vmem [#allocation4], %s165
          %s168 = ssub.s32 128, 128
          %169 = vsyncadd %s163, %s168
          %s170 = sadd.s32 %s24, %s23
          %s171 = smul.addr %s170, 128
          %s172 = scalar_lea.hbm %s0, %s171
          %s174 = sshll.u32 %s166, 4
          %s175 = int_to_ptr.vmem [resolvable:$true] %s174
          %177 = dma.hbm_to_vmem [thread:$0]  %s172, 128, %s175, %s163
        $region28: #{tpu_custom_call.1} parent=23 // pred_fallthru
          _
      $region24: #{tpu_custom_call.1} parent=5 // pred_fallthru
        _
      %p178 = scmp.le.s32.totalorder 1, %s16
      %p179 = scmp.lt.s32.totalorder %s16, 3
      %p180 = pnand %p178, %p179
      %p181 = pneg %p180
      // Predicated region
      $region29: #{tpu_custom_call.1} parent=5 // pred_check
        _
      $region30: #{tpu_custom_call.1} parent=5 // pred_check_branch
        %183 = sbr.rel (%p180) target = $region32
      $region31: #{tpu_custom_call.1} parent=5 // pred_region
        %s184 = ssub.s32 %s16, 1
        %s185 = sand.u32 %s43, 1
        %s186 = scalar_lea.sflag [#allocation5], %s185
        %s187 = sand.u32 %s43, 1
        %s188 = smul.addr %s187, 8
        %s189 = scalar_lea.vmem [#allocation4], %s188
        // Predicated region
        $region33: #{tpu_custom_call.1} parent=31 // pred_check
          %p190 = pneg %p56
        $region34: #{tpu_custom_call.1} parent=31 // pred_check_branch
          %192 = sbr.rel (%p190) target = $region36
        $region35: #{tpu_custom_call.1} parent=31 // pred_region
          %193 = dma.done %s186, 128
        $region36: #{tpu_custom_call.1} parent=31 // pred_fallthru
          _
        // Predicated region
        $region37: #{tpu_custom_call.1} parent=31 // pred_check
          %p194 = pneg %p77
        $region38: #{tpu_custom_call.1} parent=31 // pred_check_branch
          %196 = sbr.rel (%p194) target = $region40
        $region39: #{tpu_custom_call.1} parent=31 // pred_region
          %197 = dma.done [#allocation8], 512
        $region40: #{tpu_custom_call.1} parent=31 // pred_fallthru
          _
        %s198 = sand.u32 %s43, 1
        %s199 = scalar_lea.sflag [#allocation5], %s198
        %s200 = sand.u32 %s43, 1
        %s201 = smul.addr %s200, 8
        %s202 = scalar_lea.vmem [#allocation4], %s201
        %p203 = pneg %p56
        %p204 = pneg %p53
        %p205 = pneg %p77
        %p206 = pneg %p74
        %p207 = pneg %p98
        %p208 = pneg %p95
        %p209 = pneg %p124
        %p210 = pneg %p121
        %s211 = sand.u32 %s111, 1
        %s212 = scalar_lea.sflag [#allocation6], %s211
        %s213 = sand.u32 %s111, 1
        %s214 = scalar_lea.vmem [#allocation9], %s213
        %p215 = scmp.eq.s32.totalorder %s26, 0
        // Predicated region
        $region41: #{tpu_custom_call.1} parent=31 // pred_check
          %p216 = pneg %p215
        $region42: #{tpu_custom_call.1} parent=31 // pred_check_branch
          %218 = sbr.rel (%p216) target = $region44
        $region43: #{tpu_custom_call.1} parent=31 // pred_region
          %219 = vst [vmem:[#allocation2] sm:$0x1] 0.0
          %220 = vst [vmem:[#allocation3] sm:$0x1] 0.0
        $region44: #{tpu_custom_call.1} parent=31 // pred_fallthru
          _
        %v221 = vld [vmem:[%s189] sm:$0xff]
        %v222 = vld [vmem:[#allocation7] sm:$0xff]
        %v223 = vld [vmem:[#allocation7 + $0x8] sm:$0xff]
        %v224 = vld [vmem:[#allocation7 + $0x10] sm:$0xff]
        %v225 = vld [vmem:[#allocation7 + $0x18] sm:$0xff]
        %vm226 = vcmask 261120
        %v228 = vsel %vm226, %v221, 0
        %230 = vmatprep.subr.mxu0 0.0
        %231 = vmatpush1.msra.mxu0 %v222
        %232 = vmatprep.subr.mxu0 0.0
        %233 = vmatpush1.msra.mxu0 %v223
        %234 = vmatprep.subr.mxu0 0.0
        %235 = vmatpush1.msra.mxu0 %v224
        %236 = vmatprep.subr.mxu0 0.0
        %237 = vmatpush1.msra.mxu0 %v225
        %238 = vmatprep.subr.mxu0 0.0
        %239 = vmatpush1.msra.mxu0 0.0
        %240 = vmatprep.subr.mxu0 0.0
        %241 = vmatpush1.msra.mxu0 0.0
        %242 = vmatprep.subr.mxu0 0.0
        %243 = vmatpush1.msra.mxu0 0.0
        %244 = vmatprep.subr.mxu0 0.0
        %245 = vmatpush1.msra.mxu0 0.0
        %246 = vmatprep.subr.mxu0 0.0
        %247 = vmatpush1.msra.mxu0 0.0
        %248 = vmatprep.subr.mxu0 0.0
        %249 = vmatpush1.msra.mxu0 0.0
        %250 = vmatprep.subr.mxu0 0.0
        %251 = vmatpush1.msra.mxu0 0.0
        %252 = vmatprep.subr.mxu0 0.0
        %253 = vmatpush1.msra.mxu0 0.0
        %254 = vmatprep.subr.mxu0 0.0
        %255 = vmatpush1.msra.mxu0 0.0
        %256 = vmatprep.subr.mxu0 0.0
        %257 = vmatpush1.msra.mxu0 0.0
        %258 = vmatprep.subr.mxu0 0.0
        %259 = vmatpush1.msra.mxu0 0.0
        %260 = vmatprep.subr.mxu0 0.0
        %261 = vmatpush1.msra.mxu0 0.0
        %262 = vmatprep.subr.mxu0 0.0
        %263 = vmatpush1.msra.mxu0 0.0
        %264 = vmatprep.subr.mxu0 0.0
        %265 = vmatpush1.msra.mxu0 0.0
        %266 = vmatprep.subr.mxu0 0.0
        %267 = vmatpush1.msra.mxu0 0.0
        %268 = vmatprep.subr.mxu0 0.0
        %269 = vmatpush1.msra.mxu0 0.0
        %270 = vmatprep.subr.mxu0 0.0
        %271 = vmatpush1.msra.mxu0 0.0
        %272 = vmatprep.subr.mxu0 0.0
        %273 = vmatpush1.msra.mxu0 0.0
        %274 = vmatprep.subr.mxu0 0.0
        %275 = vmatpush1.msra.mxu0 0.0
        %276 = vmatprep.subr.mxu0 0.0
        %277 = vmatpush1.msra.mxu0 0.0
        %278 = vmatprep.subr.mxu0 0.0
        %279 = vmatpush1.msra.mxu0 0.0
        %280 = vmatprep.subr.mxu0 0.0
        %281 = vmatpush1.msra.mxu0 0.0
        %282 = vmatprep.subr.mxu0 0.0
        %283 = vmatpush1.msra.mxu0 0.0
        %284 = vmatprep.subr.mxu0 0.0
        %285 = vmatpush1.msra.mxu0 0.0
        %286 = vmatprep.subr.mxu0 0.0
        %287 = vmatpush1.msra.mxu0 0.0
        %288 = vmatprep.subr.mxu0 0.0
        %289 = vmatpush1.msra.mxu0 0.0
        %290 = vmatprep.subr.mxu0 0.0
        %291 = vmatpush1.msra.mxu0 0.0
        %292 = vmatprep.subr.mxu0 0.0
        %293 = vmatpush1.msra.mxu0 0.0
        %294 = vmatprep.mubr.f32.mxu0 0.0
        %295 = vmatmul.mubr.f32.gmra.mrb[0].mxu0 %v228
        %v296 = vpop.f32.mrb[0].mxu0
        %v297 = vadd.f32 0.0, %v296
        %v298 = vpop.f32.mrb[0].mxu0
        %299 = vdwg.mxu0
        %v300 = vld [vmem:[#allocation2] sm:$0x1]
        %v301 = vrot.slane %v297, 4
        %v302 = vadd.f32 %v297, %v301
        %v303 = vrot.slane %v302, 2
        %v304 = vadd.f32 %v302, %v303
        %v305 = vrot.slane %v304, 1
        %v306 = vadd.f32 %v304, %v305
        %v307 = vadd.f32 %v300, %v306
        %308 = vst [vmem:[#allocation2] sm:$0x1] %v307
        %v309 = vld [vmem:[#allocation3] sm:$0x1]
        %v310 = vmul.f32 %v297, %v297
        %v311 = vrot.slane %v310, 4
        %v312 = vadd.f32 %v310, %v311
        %v313 = vrot.slane %v312, 2
        %v314 = vadd.f32 %v312, %v313
        %v315 = vrot.slane %v314, 1
        %v316 = vadd.f32 %v314, %v315
        %v317 = vadd.f32 %v309, %v316
        %318 = vst [vmem:[#allocation3] sm:$0x1] %v317
        // Predicated region
        $region45: #{tpu_custom_call.1} parent=31 // pred_check
          %p319 = pneg %p215
        $region46: #{tpu_custom_call.1} parent=31 // pred_check_branch
          %321 = sbr.rel (%p319) target = $region48
        $region47: #{tpu_custom_call.1} parent=31 // pred_region
          %v322 = vld [vmem:[%s2] sm:$0x3]
          %v323 = vld [vmem:[#allocation3] sm:$0x1]
          %v324 = vmul.f32 %v323, 24.0
          %v325 = vld [vmem:[#allocation2] sm:$0x1]
          %v326 = vmul.f32 %v325, 2.0
          %v327 = vmul.f32 %v326, %v322
          %v328 = vsub.f32 %v324, %v327
          %v329 = vmul.f32 %v322, 8.0
          %v332 = vunpack.c.l.s4 1966171168
          %v333 = vunpack.c.0.s8 %v332
          %v334 = vlaneseq
          %v335 = vshrl.u32 %v334, 7
          %v336 = vsub.s32 %v333, %v335
          %v337 = vrot.slane %v329, %v336
          %v338 = vcombine.high %v337, %v337
          %v340 = vunpack.c.l.s4 1966171168
          %v341 = vunpack.c.0.s8 %v340
          %v342 = vlaneseq
          %v343 = vshrl.u32 %v342, 7
          %v344 = vsub.s32 %v341, %v343
          %v345 = vrot.slane %v338, %v344
          %v347 = vadd.f32 %v328, %v345
          %v348 = vlaneseq
          %v349 = vand.u32 %v348, 127
          %vm350 = vcmp.lt.s32.totalorder %v349, 16
          %v351 = vsel %vm350, %v347, inf
          %vm352 = vcmask 1040384
          %v353 = vsel %vm352, %v351, inf
          %354 = vmin.xlane.f32.xlu0 %v353
          %v355 = vpop.xlane.xlu0 %354
          %vm356 = vcmp.eq.f32.partialorder %v351, %v355
          %v357 = vsel %vm356, %v349, 16
          %v358 = vsel %vm352, %v357, 2147483647
          %v359 = vand.u32 %v358, 65535
          %v360 = vshra.s32 %v358, 16
          %v361 = vcvt.s32.f32 %v359
          %v362 = vcvt.s32.f32 %v360
          %363 = vmin.xlane.f32.xlu0 %v362
          %v364 = vpop.xlane.xlu0 %363
          %vm365 = vcmp.eq.f32.partialorder %v362, %v364
          %v366 = vsel %vm365, %v361, inf
          %367 = vmin.xlane.f32.xlu0 %v366
          %v368 = vpop.xlane.xlu0 %367
          %v369 = vcvt.f32.s32 %v368
          %v370 = vcvt.f32.s32 %v364
          %v371 = vshll.u32 %v370, 16
          %v372 = vadd.s32 %v371, %v369
          %373 = vst [vmem:[%s214] sm:$0x1] %v372
        $region48: #{tpu_custom_call.1} parent=31 // pred_fallthru
          _
        %s374 = sand.u32 %s111, 1
        %s375 = scalar_lea.sflag [#allocation6], %s374
        %s376 = sand.u32 %s111, 1
        %s377 = scalar_lea.vmem [#allocation9], %s376
        // Predicated region
        $region49: #{tpu_custom_call.1} parent=31 // pred_check
          %p378 = pneg %p121
        $region50: #{tpu_custom_call.1} parent=31 // pred_check_branch
          %380 = sbr.rel (%p378) target = $region52
        $region51: #{tpu_custom_call.1} parent=31 // pred_region
          %s382 = ssub.s32 16, 16
          %383 = vsyncadd %s375, %s382
          %s384 = smul.addr %s25, 16
          %s385 = scalar_lea.hbm %s3, %s384
          %s387 = sshll.u32 %s377, 4
          %s388 = int_to_ptr.vmem [resolvable:$true] %s387
          %390 = dma.vmem_to_hbm [thread:$0]  %s388, 16, %s385, %s375
        $region52: #{tpu_custom_call.1} parent=31 // pred_fallthru
          _
      $region32: #{tpu_custom_call.1} parent=5 // pred_fallthru
        _
      %p391 = scmp.le.s32.totalorder 2, %s16
      // Predicated region
      $region53: #{tpu_custom_call.1} parent=5 // pred_check
        %p392 = pneg %p391
      $region54: #{tpu_custom_call.1} parent=5 // pred_check_branch
        %394 = sbr.rel (%p392) target = $region56
      $region55: #{tpu_custom_call.1} parent=5 // pred_region
        %s395 = ssub.s32 %s16, 2
        // Predicated region
        $region57: #{tpu_custom_call.1} parent=55 // pred_check
          %p396 = pneg %p127
        $region58: #{tpu_custom_call.1} parent=55 // pred_check_branch
          %398 = sbr.rel (%p396) target = $region60
        $region59: #{tpu_custom_call.1} parent=55 // pred_region
          %s399 = sand.u32 %s112, 1
          %s400 = scalar_lea.sflag [#allocation6], %s399
          %s401 = sand.u32 %s112, 1
          %s402 = scalar_lea.vmem [#allocation9], %s401
          %403 = dma.done %s400, 16
        $region60: #{tpu_custom_call.1} parent=55 // pred_fallthru
          _
      $region56: #{tpu_custom_call.1} parent=5 // pred_fallthru
        _
    $region6: #{tpu_custom_call.1} parent=1 // loop_footer
      %s20 = sadd.s32 1, %s16
    $region7: #{tpu_custom_call.1} parent=1 // loop_footer_branch
      %15 = sbr.rel target = $region3
    $region8: #{tpu_custom_call.1} parent=1 // loop_exit
      _
    %404 = vsyncpa [#allocation5], 1
    %s405 = scalar_lea.sflag [#allocation5], 1
    %406 = vsyncpa %s405, 1
    %407 = vsyncpa [#allocation8], 1
    %408 = vsyncpa [#allocation6], 1
    %s409 = scalar_lea.sflag [#allocation6], 1
    %410 = vsyncpa %s409, 1

</llo_original>
